<compile_context>
chip_gen: v7x
topology: tpu7x:2x2x1
jax: 0.10.0
libtpu: 0.0.40
codegen_flags: <defaults>
</compile_context>

<pallas_src>
import functools

import jax
import jax.numpy as jnp
from jax.experimental import pallas as pl
from jax.experimental.pallas import tpu as pltpu

_LANE = 128
_SUBLANE = 8


def _round_up(x, m):
    return (x + m - 1) // m * m


def _choose_tiles(B, C, itemsize, block_b=None, block_c=None):
    """Pick (batch_tile, class_tile, padded_B, padded_C).

    ~8 MiB per logits tile; the BlockSpec pipeline double-buffers it, leaving
    ample headroom under the scoped-VMEM default on v5e/v6e/v7x.
    """
    tile_budget = 8 * 1024 * 1024

    if block_c is not None:
        tc = block_c                     # caller-forced (must be mult. of 128 or == C)
    elif C * itemsize * 64 <= tile_budget:
        tc = C                           # whole class axis fits with >=64 rows
    else:
        tc = 2048                        # vocab-scale C: tile classes (mult. of 128)
    c_pad = C if tc == C else _round_up(C, tc)

    if block_b is not None:
        tb = block_b
    else:
        rows = max(_SUBLANE, tile_budget // max(1, tc * itemsize))
        tb = min(1024, max(_SUBLANE, (rows // _SUBLANE) * _SUBLANE))
        tb = min(tb, _round_up(B, _SUBLANE))
    b_pad = _round_up(B, tb)
    return tb, tc, b_pad, c_pad


def _ce_label_smooth_kernel(logits_ref, targets_ref, loss_ref,
                            m_sc, s_sc, sumx_sc, xt_sc, *,
                            epsilon: float, num_classes: int, needs_mask: bool):
    """One (batch_tile, class_tile) step of fused label-smoothed CE.

    logits_ref : [TB, TC] input dtype (VMEM)   targets_ref: [TB, 1] int32
    loss_ref   : [TB, 1] f32 (resident across the class axis)
    m/s/sumx/xt scratch: [TB, 1] f32 online-LSE accumulators.
    """
    ci = pl.program_id(1)
    nc = pl.num_programs(1)

    x = logits_ref[...].astype(jnp.float32)            # [TB, TC]
    t = targets_ref[...]                                # [TB, 1] int32
    tb, tc = x.shape

    @pl.when(ci == 0)
    def _init():
        m_sc[...] = jnp.full_like(m_sc, -jnp.inf)
        s_sc[...] = jnp.zeros_like(s_sc)
        sumx_sc[...] = jnp.zeros_like(sumx_sc)
        xt_sc[...] = jnp.zeros_like(xt_sc)

    # Global class ids for this tile's columns.
    col = jax.lax.broadcasted_iota(jnp.int32, (tb, tc), 1) + ci * tc

    # Only the log-sum-exp path needs masking of class-padding columns
    # (padded logits are zeros, so they already contribute 0 to sum(x)).
    x_lse = jnp.where(col < num_classes, x, -jnp.inf) if needs_mask else x

    # Online log-sum-exp over the class axis.
    m_prev = m_sc[...]
    m_new = jnp.maximum(m_prev, jnp.max(x_lse, axis=1, keepdims=True))
    s_sc[...] = (s_sc[...] * jnp.exp(m_prev - m_new)
                 + jnp.sum(jnp.exp(x_lse - m_new), axis=1, keepdims=True))
    m_sc[...] = m_new

    # Running sum(x) and x[target] (one compare+select, no onehot temporaries).
    sumx_sc[...] = sumx_sc[...] + jnp.sum(x, axis=1, keepdims=True)
    xt_sc[...] = xt_sc[...] + jnp.sum(jnp.where(col == t, x, 0.0),
                                      axis=1, keepdims=True)

    @pl.when(ci == nc - 1)
    def _finalize():
        lse = m_sc[...] + jnp.log(s_sc[...])            # absolute log-sum-exp
        cf = float(num_classes)
        # per_sample = (1-eps)*(lse - x[t]) + (eps/C)*(C*lse - sum(x))
        loss_ref[...] = ((1.0 - epsilon) * (lse - xt_sc[...])
                         + (epsilon / cf) * (cf * lse - sumx_sc[...]))


def cross_entropy_label_smooth(logits, targets, *, epsilon: float,
                               reduction: bool = True,
                               block_b: int | None = None,
                               block_c: int | None = None):
    """JAX/Pallas equivalent of CrossEntropyLabelSmooth.forward.

    logits : [B, C] float (any float dtype; cast to f32 inside the kernel)
    targets: [B] int class indices
    """
    B, C = logits.shape
    itemsize = jnp.dtype(logits.dtype).itemsize
    tb, tc, b_pad, c_pad = _choose_tiles(B, C, itemsize, block_b, block_c)

    # Pad so the blocks tile the arrays exactly (padded rows are sliced off,
    # padded class columns are masked / zero-contributing in the kernel).
    x = logits
    if b_pad != B or c_pad != C:
        x = jnp.pad(x, ((0, b_pad - B), (0, c_pad - C)))
    t = targets.astype(jnp.int32)
    if b_pad != B:
        t = jnp.pad(t, (0, b_pad - B))
    t = t.reshape(b_pad, 1)

    grid = (b_pad // tb, c_pad // tc)
    kernel = functools.partial(_ce_label_smooth_kernel,
                               epsilon=float(epsilon),
                               num_classes=C,
                               needs_mask=(c_pad != C))

    per_sample = pl.pallas_call(
        kernel,
        out_shape=jax.ShapeDtypeStruct((b_pad, 1), jnp.float32),
        grid_spec=pltpu.PrefetchScalarGridSpec(
            num_scalar_prefetch=0,
            grid=grid,
            in_specs=[
                pl.BlockSpec((tb, tc), lambda bi, ci: (bi, ci)),
                pl.BlockSpec((tb, 1), lambda bi, ci: (bi, 0)),
            ],
            out_specs=pl.BlockSpec((tb, 1), lambda bi, ci: (bi, 0)),
            scratch_shapes=[pltpu.VMEM((tb, 1), jnp.float32)] * 4,
        ),
        compiler_params=pltpu.CompilerParams(
            dimension_semantics=("parallel", "arbitrary"),
        ),
    )(x, t)

    per_sample = per_sample[:B, 0]                      # [B]
    if reduction:
        # (-t * log_p).mean(0).sum() == mean over batch of per-sample sums.
        return jnp.mean(per_sample)
    return per_sample


def _reference(logits, targets, epsilon, reduction=True):
    """Plain-JAX reference mirroring the PyTorch module exactly."""
    logits = logits.astype(jnp.float32)
    log_probs = jax.nn.log_softmax(logits, axis=1)
    C = logits.shape[1]
    onehot = jax.nn.one_hot(targets, C, dtype=jnp.float32)
    smoothed = (1.0 - epsilon) * onehot + epsilon / C
    if reduction:
        return (-smoothed * log_probs).mean(0).sum()
    return (-smoothed * log_probs).sum(1)


if __name__ == "__main__":
    key = jax.random.PRNGKey(0)
    k1, k2, k3, k4, k5, k6 = jax.random.split(key, 6)
    epsilon = 0.1

    # --- Test 1: small single-tile case (B=8, C=32), f32 ---
    B, C = 8, 32
    logits = jax.random.normal(k1, (B, C), dtype=jnp.float32)
    targets = jax.random.randint(k2, (B,), 0, C, dtype=jnp.int32)
    loss = jax.block_until_ready(
        cross_entropy_label_smooth(logits, targets, epsilon=epsilon,
                                   reduction=True))
    ref = _reference(logits, targets, epsilon, True)
    assert jnp.allclose(loss, ref, atol=1e-5, rtol=1e-5), (loss, ref)
    loss_v = jax.block_until_ready(
        cross_entropy_label_smooth(logits, targets, epsilon=epsilon,
                                   reduction=False))
    ref_v = _reference(logits, targets, epsilon, False)
    assert jnp.allclose(loss_v, ref_v, atol=1e-5, rtol=1e-5)

    # --- Test 2: batch+class tiling with padding (online LSE path) ---
    B, C = 20, 200
    logits = jax.random.normal(k3, (B, C), dtype=jnp.float32)
    targets = jax.random.randint(k4, (B,), 0, C, dtype=jnp.int32)
    loss = jax.block_until_ready(
        cross_entropy_label_smooth(logits, targets, epsilon=epsilon,
                                   reduction=True, block_b=8, block_c=128))
    ref = _reference(logits, targets, epsilon, True)
    assert jnp.allclose(loss, ref, atol=1e-5, rtol=1e-5), (loss, ref)
    loss_v = jax.block_until_ready(
        cross_entropy_label_smooth(logits, targets, epsilon=epsilon,
                                   reduction=False, block_b=8, block_c=128))
    ref_v = _reference(logits, targets, epsilon, False)
    assert jnp.allclose(loss_v, ref_v, atol=1e-5, rtol=1e-5)

    # --- Test 3: bf16 logits stay bf16 in HBM; the cast happens in-kernel ---
    B, C = 16, 256
    logits = jax.random.normal(k5, (B, C), dtype=jnp.bfloat16)
    targets = jax.random.randint(k6, (B,), 0, C, dtype=jnp.int32)
    loss = jax.block_until_ready(
        cross_entropy_label_smooth(logits, targets, epsilon=epsilon,
                                   reduction=True, block_c=128))
    ref = _reference(logits, targets, epsilon, True)
    assert jnp.allclose(loss, ref, atol=2e-2, rtol=2e-2), (loss, ref)

    print("KERNEL_OK")
</pallas_src>

<mosaic_0001>
module attributes {stable_mosaic.version = 11 : i64} {
  func.func @_ce_label_smooth_kernel(%arg0: i32, %arg1: i32, %arg2: memref<8x32xf32, #tpu.memory_space<vmem>>, %arg3: memref<8x1xi32, #tpu.memory_space<vmem>>, %arg4: memref<8x1xf32, #tpu.memory_space<vmem>>, %arg5: memref<8x1xf32, #tpu.memory_space<vmem>>, %arg6: memref<8x1xf32, #tpu.memory_space<vmem>>, %arg7: memref<8x1xf32, #tpu.memory_space<vmem>>, %arg8: memref<8x1xf32, #tpu.memory_space<vmem>>) attributes {dimension_semantics = [#tpu.dimension_semantics<parallel>, #tpu.dimension_semantics<arbitrary>], iteration_bounds = array<i64: 1, 1>, scalar_prefetch = 0 : i64, scratch_operands = 4 : i64, tpu.core_type = #tpu.core_type<tc>, window_params = [{transform_indices = @transform_0, window_bounds = array<i64: 8, 32>}, {transform_indices = @transform_1, window_bounds = array<i64: 8, 1>}, {transform_indices = @transform_2, window_bounds = array<i64: 8, 1>}]} {
    %c0 = arith.constant 0 : index
    %c0_0 = arith.constant 0 : index
    %0 = vector.load %arg2[%c0, %c0_0] : memref<8x32xf32, #tpu.memory_space<vmem>>, vector<8x32xf32>
    %c0_1 = arith.constant 0 : index
    %c0_2 = arith.constant 0 : index
    %1 = vector.load %arg3[%c0_1, %c0_2] : memref<8x1xi32, #tpu.memory_space<vmem>>, vector<8x1xi32>
    %c0_i32 = arith.constant 0 : i32
    %2 = arith.cmpi eq, %arg1, %c0_i32 : i32
    %3 = arith.extui %2 : i1 to i32
    %c0_i32_3 = arith.constant 0 : i32
    %4 = arith.cmpi ne, %3, %c0_i32_3 : i32
    scf.if %4 {
      %cst_26 = arith.constant 0xFF800000 : f32
      %42 = vector.broadcast %cst_26 : f32 to vector<8x1xf32>
      %c0_27 = arith.constant 0 : index
      %c0_28 = arith.constant 0 : index
      %43 = vector.load %arg5[%c0_27, %c0_28] : memref<8x1xf32, #tpu.memory_space<vmem>>, vector<8x1xf32>
      tpu.vector_store %arg5[%c0_27, %c0_28], %42 {strides = array<i32>} : memref<8x1xf32, #tpu.memory_space<vmem>>, vector<8x1xf32>,
      %cst_29 = arith.constant 0.000000e+00 : f32
      %44 = vector.broadcast %cst_29 : f32 to vector<8x1xf32>
      %c0_30 = arith.constant 0 : index
      %c0_31 = arith.constant 0 : index
      %45 = vector.load %arg6[%c0_30, %c0_31] : memref<8x1xf32, #tpu.memory_space<vmem>>, vector<8x1xf32>
      tpu.vector_store %arg6[%c0_30, %c0_31], %44 {strides = array<i32>} : memref<8x1xf32, #tpu.memory_space<vmem>>, vector<8x1xf32>,
      %cst_32 = arith.constant 0.000000e+00 : f32
      %46 = vector.broadcast %cst_32 : f32 to vector<8x1xf32>
      %c0_33 = arith.constant 0 : index
      %c0_34 = arith.constant 0 : index
      %47 = vector.load %arg7[%c0_33, %c0_34] : memref<8x1xf32, #tpu.memory_space<vmem>>, vector<8x1xf32>
      tpu.vector_store %arg7[%c0_33, %c0_34], %46 {strides = array<i32>} : memref<8x1xf32, #tpu.memory_space<vmem>>, vector<8x1xf32>,
      %cst_35 = arith.constant 0.000000e+00 : f32
      %48 = vector.broadcast %cst_35 : f32 to vector<8x1xf32>
      %c0_36 = arith.constant 0 : index
      %c0_37 = arith.constant 0 : index
      %49 = vector.load %arg8[%c0_36, %c0_37] : memref<8x1xf32, #tpu.memory_space<vmem>>, vector<8x1xf32>
      tpu.vector_store %arg8[%c0_36, %c0_37], %48 {strides = array<i32>} : memref<8x1xf32, #tpu.memory_space<vmem>>, vector<8x1xf32>,
    } else {
    }
    %5 = tpu.iota {dimensions = array<i32: 1>} : vector<8x32xi32>
    %c32_i32 = arith.constant 32 : i32
    %6 = arith.muli %arg1, %c32_i32 : i32
    %7 = vector.broadcast %6 : i32 to vector<8x32xi32>
    %8 = arith.addi %5, %7 : vector<8x32xi32>
    %c0_4 = arith.constant 0 : index
    %c0_5 = arith.constant 0 : index
    %9 = vector.load %arg5[%c0_4, %c0_5] : memref<8x1xf32, #tpu.memory_space<vmem>>, vector<8x1xf32>
    %cst = arith.constant dense<0xFF800000> : vector<8xf32>
    %10 = vector.multi_reduction <maximumf>, %0, %cst [1] : vector<8x32xf32> to vector<8xf32>
    %11 = vector.shape_cast %10 : vector<8xf32> to vector<8x1xf32>
    %12 = arith.maximumf %9, %11 : vector<8x1xf32>
    %c0_6 = arith.constant 0 : index
    %c0_7 = arith.constant 0 : index
    %13 = vector.load %arg6[%c0_6, %c0_7] : memref<8x1xf32, #tpu.memory_space<vmem>>, vector<8x1xf32>
    %14 = arith.subf %9, %12 : vector<8x1xf32>
    %15 = math.exp %14 : vector<8x1xf32>
    %16 = arith.mulf %13, %15 : vector<8x1xf32>
    %17 = vector.broadcast %12 : vector<8x1xf32> to vector<8x32xf32>
    %18 = arith.subf %0, %17 : vector<8x32xf32>
    %19 = math.exp %18 : vector<8x32xf32>
    %cst_8 = arith.constant dense<0.000000e+00> : vector<8xf32>
    %20 = vector.multi_reduction <add>, %19, %cst_8 [1] : vector<8x32xf32> to vector<8xf32>
    %21 = vector.shape_cast %20 : vector<8xf32> to vector<8x1xf32>
    %22 = arith.addf %16, %21 : vector<8x1xf32>
    %c0_9 = arith.constant 0 : index
    %c0_10 = arith.constant 0 : index
    %23 = vector.load %arg6[%c0_9, %c0_10] : memref<8x1xf32, #tpu.memory_space<vmem>>, vector<8x1xf32>
    tpu.vector_store %arg6[%c0_9, %c0_10], %22 {strides = array<i32>} : memref<8x1xf32, #tpu.memory_space<vmem>>, vector<8x1xf32>,
    %c0_11 = arith.constant 0 : index
    %c0_12 = arith.constant 0 : index
    %24 = vector.load %arg5[%c0_11, %c0_12] : memref<8x1xf32, #tpu.memory_space<vmem>>, vector<8x1xf32>
    tpu.vector_store %arg5[%c0_11, %c0_12], %12 {strides = array<i32>} : memref<8x1xf32, #tpu.memory_space<vmem>>, vector<8x1xf32>,
    %c0_13 = arith.constant 0 : index
    %c0_14 = arith.constant 0 : index
    %25 = vector.load %arg7[%c0_13, %c0_14] : memref<8x1xf32, #tpu.memory_space<vmem>>, vector<8x1xf32>
    %cst_15 = arith.constant dense<0.000000e+00> : vector<8xf32>
    %26 = vector.multi_reduction <add>, %0, %cst_15 [1] : vector<8x32xf32> to vector<8xf32>
    %27 = vector.shape_cast %26 : vector<8xf32> to vector<8x1xf32>
    %28 = arith.addf %25, %27 : vector<8x1xf32>
    %c0_16 = arith.constant 0 : index
    %c0_17 = arith.constant 0 : index
    %29 = vector.load %arg7[%c0_16, %c0_17] : memref<8x1xf32, #tpu.memory_space<vmem>>, vector<8x1xf32>
    tpu.vector_store %arg7[%c0_16, %c0_17], %28 {strides = array<i32>} : memref<8x1xf32, #tpu.memory_space<vmem>>, vector<8x1xf32>,
    %c0_18 = arith.constant 0 : index
    %c0_19 = arith.constant 0 : index
    %30 = vector.load %arg8[%c0_18, %c0_19] : memref<8x1xf32, #tpu.memory_space<vmem>>, vector<8x1xf32>
    %31 = vector.broadcast %1 : vector<8x1xi32> to vector<8x32xi32>
    %32 = arith.cmpi eq, %8, %31 : vector<8x32xi32>
    %cst_20 = arith.constant 0.000000e+00 : f32
    %33 = vector.broadcast %cst_20 : f32 to vector<8x32xf32>
    %34 = arith.select %32, %0, %33 : vector<8x32xi1>, vector<8x32xf32>
    %cst_21 = arith.constant dense<0.000000e+00> : vector<8xf32>
    %35 = vector.multi_reduction <add>, %34, %cst_21 [1] : vector<8x32xf32> to vector<8xf32>
    %36 = vector.shape_cast %35 : vector<8xf32> to vector<8x1xf32>
    %37 = arith.addf %30, %36 : vector<8x1xf32>
    %c0_22 = arith.constant 0 : index
    %c0_23 = arith.constant 0 : index
    %38 = vector.load %arg8[%c0_22, %c0_23] : memref<8x1xf32, #tpu.memory_space<vmem>>, vector<8x1xf32>
    tpu.vector_store %arg8[%c0_22, %c0_23], %37 {strides = array<i32>} : memref<8x1xf32, #tpu.memory_space<vmem>>, vector<8x1xf32>,
    %c0_i32_24 = arith.constant 0 : i32
    %39 = arith.cmpi eq, %arg1, %c0_i32_24 : i32
    %40 = arith.extui %39 : i1 to i32
    %c0_i32_25 = arith.constant 0 : i32
    %41 = arith.cmpi ne, %40, %c0_i32_25 : i32
    scf.if %41 {
      %c0_26 = arith.constant 0 : index
      %c0_27 = arith.constant 0 : index
      %42 = vector.load %arg5[%c0_26, %c0_27] : memref<8x1xf32, #tpu.memory_space<vmem>>, vector<8x1xf32>
      %c0_28 = arith.constant 0 : index
      %c0_29 = arith.constant 0 : index
      %43 = vector.load %arg6[%c0_28, %c0_29] : memref<8x1xf32, #tpu.memory_space<vmem>>, vector<8x1xf32>
      %44 = math.log %43 : vector<8x1xf32>
      %45 = arith.addf %42, %44 : vector<8x1xf32>
      %c0_30 = arith.constant 0 : index
      %c0_31 = arith.constant 0 : index
      %46 = vector.load %arg8[%c0_30, %c0_31] : memref<8x1xf32, #tpu.memory_space<vmem>>, vector<8x1xf32>
      %47 = arith.subf %45, %46 : vector<8x1xf32>
      %cst_32 = arith.constant 0.899999976 : f32
      %48 = vector.broadcast %cst_32 : f32 to vector<8x1xf32>
      %49 = arith.mulf %48, %47 : vector<8x1xf32>
      %cst_33 = arith.constant 3.200000e+01 : f32
      %50 = vector.broadcast %cst_33 : f32 to vector<8x1xf32>
      %51 = arith.mulf %50, %45 : vector<8x1xf32>
      %c0_34 = arith.constant 0 : index
      %c0_35 = arith.constant 0 : index
      %52 = vector.load %arg7[%c0_34, %c0_35] : memref<8x1xf32, #tpu.memory_space<vmem>>, vector<8x1xf32>
      %53 = arith.subf %51, %52 : vector<8x1xf32>
      %cst_36 = arith.constant 3.125000e-03 : f32
      %54 = vector.broadcast %cst_36 : f32 to vector<8x1xf32>
      %55 = arith.mulf %54, %53 : vector<8x1xf32>
      %56 = arith.addf %49, %55 : vector<8x1xf32>
      %c0_37 = arith.constant 0 : index
      %c0_38 = arith.constant 0 : index
      %57 = vector.load %arg4[%c0_37, %c0_38] : memref<8x1xf32, #tpu.memory_space<vmem>>, vector<8x1xf32>
      tpu.vector_store %arg4[%c0_37, %c0_38], %56 {strides = array<i32>} : memref<8x1xf32, #tpu.memory_space<vmem>>, vector<8x1xf32>,
    } else {
    }
    return
  }
  func.func @transform_0(%arg0: i32, %arg1: i32) -> (i32, i32) {
    %c0_i32 = arith.constant 0 : i32
    return %arg0, %arg1 : i32, i32
  }
  func.func @transform_1(%arg0: i32, %arg1: i32) -> (i32, i32) {
    %c0_i32 = arith.constant 0 : i32
    %c0_i32_0 = arith.constant 0 : i32
    return %arg0, %c0_i32 : i32, i32
  }
  func.func @transform_2(%arg0: i32, %arg1: i32) -> (i32, i32) {
    %c0_i32 = arith.constant 0 : i32
    %c0_i32_0 = arith.constant 0 : i32
    return %arg0, %c0_i32 : i32, i32
  }
}

</mosaic_0001>

<llo_original>
// kernel: tpu_custom_call.1
$region0: #{tpu_custom_call.1}
  #allocation0 [shape = 'u32[]', space=smem, size = 0x4, offset = 0x4, fixed_abs, tag = 'smem constant byte address 0x4 - core index']
  #allocation1 [shape = 'u32[144,128]{1,0:T(1,128)}', space=vmem, size = 0x12000, scoped, tag = 'internal scratch']
  #allocation2 [shape = 'f32[8,1]{1,0:T(8,128)}', space=vmem, size = 0x1000, scoped, tag = 'scratch operand']
  #allocation3 [shape = 'f32[8,1]{1,0:T(8,128)}', space=vmem, size = 0x1000, scoped, tag = 'scratch operand']
  #allocation4 [shape = 'f32[8,1]{1,0:T(8,128)}', space=vmem, size = 0x1000, scoped, tag = 'scratch operand']
  #allocation5 [shape = 'f32[8,1]{1,0:T(8,128)}', space=vmem, size = 0x1000, scoped, tag = 'scratch operand']
  %s0 = inlined_call_operand.vmem [shape: f32[8,32], index: 0, kind: input, shape index: {}]
  %s1 = inlined_call_operand.vmem [shape: s32[8,1], index: 1, kind: input, shape index: {}]
  %s2 = inlined_call_operand.vmem [shape: f32[8,1], index: 2, kind: output, shape index: {}]
  %s3 = sld [smem:[#allocation0]]
  $region26: #{tpu_custom_call.1} parent=0
    _
  %s5 = ssub.s32 1, %s3
  %s6 = scalar_select 0, %s5, %s3
  // Predicated region
  $region2: #{tpu_custom_call.1} parent=0 // pred_check
    _
  $region3: #{tpu_custom_call.1} parent=0 // pred_check_branch
    %8 = sbr.rel (0) target = $region5
  $region4: #{tpu_custom_call.1} parent=0 // pred_region
    _
  $region5: #{tpu_custom_call.1} parent=0 // pred_fallthru
    _
  // Predicated region
  $region6: #{tpu_custom_call.1} parent=0 // pred_check
    _
  $region7: #{tpu_custom_call.1} parent=0 // pred_check_branch
    %10 = sbr.rel (0) target = $region9
  $region8: #{tpu_custom_call.1} parent=0 // pred_region
    _
  $region9: #{tpu_custom_call.1} parent=0 // pred_fallthru
    _
  %v11 = vld [vmem:[%s0] sm:$0xff]
  %v12 = vld [vmem:[%s1] sm:$0xff]
  %p13 = scmp.eq.s32.totalorder 0, 0
  // Predicated region
  $region10: #{tpu_custom_call.1} parent=0 // pred_check
    %p14 = pneg %p13
  $region11: #{tpu_custom_call.1} parent=0 // pred_check_branch
    %16 = sbr.rel (%p14) target = $region13
  $region12: #{tpu_custom_call.1} parent=0 // pred_region
    %vm17 = vcmask 7168
    %18 = vst.msk [vmem:[#allocation2] sm:$0xff] %vm17, -inf
    %19 = vst.msk [vmem:[#allocation3] sm:$0xff] %vm17, 0.0
    %20 = vst.msk [vmem:[#allocation4] sm:$0xff] %vm17, 0.0
    %21 = vst.msk [vmem:[#allocation5] sm:$0xff] %vm17, 0.0
  $region13: #{tpu_custom_call.1} parent=0 // pred_fallthru
    _
  %v22 = vlaneseq
  %v23 = vand.u32 %v22, 127
  %s24 = smul.u32 0, 32
  %v25 = vstv %s24
  %v26 = vadd.s32 %v23, %v25
  %v27 = vld [vmem:[#allocation2] sm:$0xff]
  %vm28 = vcmask 261120
  %v29 = vsel %vm28, %v11, -inf
  %30 = vmax.xlane.f32.xlu0 %v29
  %v31 = vpop.xlane.xlu0 %30
  %v32 = vmax.f32 %v27, %v31
  %v33 = vld [vmem:[#allocation3] sm:$0xff]
  %v34 = vsub.f32 %v27, %v32
  %v35 = vmul.f32 %v34, 1.442695
  %v36 = vpow.pop %v35
  %v37 = vmul.f32 %v33, %v36
  %39 = vset.pattern.permute.xlu0 0
  %40 = vperm.xlu0 %39, %v32
  %v41 = vpop.permute.xlu0 %40
  %v43 = vsub.f32 %v11, %v41
  %v44 = vmul.f32 %v43, 1.442695
  %v45 = vpow.pop %v44
  %v46 = vsel %vm28, %v45, 0.0
  %47 = vadd.xlane.f32.xlu0 %v46
  %v48 = vpop.xlane.xlu0 %47
  %v49 = vadd.f32 %v37, %v48
  %vm50 = vcmask 7168
  %51 = vst.msk [vmem:[#allocation3] sm:$0xff] %vm50, %v49
  %52 = vst.msk [vmem:[#allocation2] sm:$0xff] %vm50, %v32
  %v53 = vld [vmem:[#allocation4] sm:$0xff]
  %v54 = vsel %vm28, %v11, 0.0
  %55 = vadd.xlane.f32.xlu0 %v54
  %v56 = vpop.xlane.xlu0 %55
  %v57 = vadd.f32 %v53, %v56
  %58 = vst.msk [vmem:[#allocation4] sm:$0xff] %vm50, %v57
  %v59 = vld [vmem:[#allocation5] sm:$0xff]
  %60 = vset.pattern.permute.xlu0 0
  %61 = vperm.xlu0 %60, %v12
  %v62 = vpop.permute.xlu0 %61
  %vm63 = vcmp.eq.s32.totalorder %v26, %v62
  %v64 = vsel %vm63, %v11, 0.0
  %v65 = vsel %vm28, %v64, 0.0
  %66 = vadd.xlane.f32.xlu0 %v65
  %v67 = vpop.xlane.xlu0 %66
  %v68 = vadd.f32 %v59, %v67
  %69 = vst.msk [vmem:[#allocation5] sm:$0xff] %vm50, %v68
  // Predicated region
  $region14: #{tpu_custom_call.1} parent=0 // pred_check
    %p70 = pneg %p13
  $region15: #{tpu_custom_call.1} parent=0 // pred_check_branch
    %72 = sbr.rel (%p70) target = $region17
  $region16: #{tpu_custom_call.1} parent=0 // pred_region
    %v73 = vld [vmem:[#allocation2] sm:$0xff]
    %v74 = vld [vmem:[#allocation3] sm:$0xff]
    %v75 = vlog2.pop %v74
    %v76 = vmul.f32 %v75, 0.6931472
    %v77 = vadd.f32 %v73, %v76
    %v78 = vld [vmem:[#allocation5] sm:$0xff]
    %v79 = vsub.f32 %v77, %v78
    %v80 = vmul.f32 %v79, 0.9
    %v81 = vmul.f32 %v77, 32.0
    %v82 = vld [vmem:[#allocation4] sm:$0xff]
    %v83 = vsub.f32 %v81, %v82
    %v84 = vmul.f32 %v83, 0.003125
    %v85 = vadd.f32 %v80, %v84
    %86 = vst.msk [vmem:[%s2] sm:$0xff] %vm50, %v85
  $region17: #{tpu_custom_call.1} parent=0 // pred_fallthru
    _
  // Predicated region
  $region18: #{tpu_custom_call.1} parent=0 // pred_check
    _
  $region19: #{tpu_custom_call.1} parent=0 // pred_check_branch
    %88 = sbr.rel (0) target = $region21
  $region20: #{tpu_custom_call.1} parent=0 // pred_region
    _
  $region21: #{tpu_custom_call.1} parent=0 // pred_fallthru
    _
  // Predicated region
  $region22: #{tpu_custom_call.1} parent=0 // pred_check
    _
  $region23: #{tpu_custom_call.1} parent=0 // pred_check_branch
    %90 = sbr.rel (0) target = $region25
  $region24: #{tpu_custom_call.1} parent=0 // pred_region
    _
  $region25: #{tpu_custom_call.1} parent=0 // pred_fallthru
    _

</llo_original>
